<compile_context>
chip_gen: v7x
topology: tpu7x:2x2x1
jax: 0.10.0
libtpu: 0.0.40
codegen_flags: <defaults>
</compile_context>

<pallas_src>
import functools

import jax
import jax.numpy as jnp
from jax.experimental import pallas as pl
from jax.experimental.pallas import tpu as pltpu


def _fake_quant_kernel(x_ref, scale_ref, zp_ref, o_ref, *, quant_min, quant_max):
    x = x_ref[...].astype(jnp.float32)      # (TR, TM)
    s = scale_ref[...]                      # (TR, 1) f32
    zp = zp_ref[...]                        # (TR, 1) f32 (integer-valued)
    inv_s = 1.0 / s
    # PyTorch: clamp(nearbyint(x * inv_scale + zero_point), qmin, qmax)
    # jnp.round == round-half-to-even == nearbyint's default rounding mode.
    q = jnp.round(x * inv_s + zp)
    q = jnp.clip(q, float(quant_min), float(quant_max))
    o_ref[...] = ((q - zp) * s).astype(o_ref.dtype)


def per_channel_fake_quant(x, scale, zero_point, quant_min, quant_max, axis):
    """Fake-quantize `x` per channel along `axis`, preserving the input dtype."""
    orig_shape = x.shape
    orig_dtype = x.dtype
    axis = axis % x.ndim
    C = orig_shape[axis]

    pre = 1
    for d in orig_shape[:axis]:
        pre *= d
    post = 1
    for d in orig_shape[axis + 1:]:
        post *= d

    R = pre * C          # rows (each row = one channel)
    M = post             # lane dimension

    # Layout-preserving flatten: rows are ordered p*C + c.
    x2d = x.reshape(R, M)
    scale_rows = jnp.tile(scale.astype(jnp.float32).reshape(1, C), (pre, 1)).reshape(R, 1)
    zp_rows = jnp.tile(zero_point.astype(jnp.float32).reshape(1, C), (pre, 1)).reshape(R, 1)

    # Tile sizes: sublane-aligned row tiles (8 for f32, 16 for bf16, ...) and
    # large lane-dense column tiles (multiple of 128).  Max f32 tile is
    # 256 x 2048 x 4 B = 2 MiB, so in+out double-buffered stays ~8 MiB — well
    # inside the default scoped VMEM on v5e/v6e/v7x.
    itemsize = jnp.dtype(orig_dtype).itemsize
    sub = {4: 8, 2: 16, 1: 32}.get(itemsize, 8)
    TR = min(R, 256) if R % sub == 0 else R
    TM = min(M, 2048) if M % 128 == 0 else M

    grid = (pl.cdiv(R, TR), pl.cdiv(M, TM))   # lane axis innermost

    kernel = functools.partial(
        _fake_quant_kernel, quant_min=quant_min, quant_max=quant_max
    )

    out2d = pl.pallas_call(
        kernel,
        out_shape=jax.ShapeDtypeStruct((R, M), orig_dtype),
        grid=grid,
        in_specs=[
            pl.BlockSpec((TR, TM), lambda r, m: (r, m)),
            # scale / zp depend only on the row tile -> resident across M axis.
            pl.BlockSpec((TR, 1), lambda r, m: (r, 0)),
            pl.BlockSpec((TR, 1), lambda r, m: (r, 0)),
        ],
        out_specs=pl.BlockSpec((TR, TM), lambda r, m: (r, m)),
        compiler_params=pltpu.CompilerParams(
            dimension_semantics=("parallel", "parallel")
        ),
    )(x2d, scale_rows, zp_rows)

    return out2d.reshape(orig_shape)


if __name__ == "__main__":
    key = jax.random.PRNGKey(0)
    kx, ks = jax.random.split(key)

    N, C, H, W = 2, 4, 16, 16
    axis = 1
    quant_min, quant_max = -128, 127

    x = jax.random.normal(kx, (N, C, H, W), dtype=jnp.float32) * 3.0
    # Deterministic per-channel quant params (module buffers).
    scale = jax.random.uniform(ks, (C,), dtype=jnp.float32, minval=0.01, maxval=0.1)
    zero_point = jnp.array([0, 5, -3, 10], dtype=jnp.int32)

    # ---- f32 path ----
    out = per_channel_fake_quant(x, scale, zero_point, quant_min, quant_max, axis)
    jax.block_until_ready(out)
    assert out.dtype == x.dtype

    s_b = scale.reshape(1, C, 1, 1)
    zp_b = zero_point.astype(jnp.float32).reshape(1, C, 1, 1)
    q_ref = jnp.clip(jnp.round(x / s_b + zp_b), quant_min, quant_max)
    ref = (q_ref - zp_b) * s_b
    assert jnp.allclose(out, ref, atol=1e-5), "f32 mismatch vs reference"

    # ---- bf16 path (dtype preserved end-to-end) ----
    x_bf16 = x.astype(jnp.bfloat16)
    out_bf16 = per_channel_fake_quant(
        x_bf16, scale, zero_point, quant_min, quant_max, axis
    )
    jax.block_until_ready(out_bf16)
    assert out_bf16.dtype == jnp.bfloat16

    q_ref16 = jnp.clip(
        jnp.round(x_bf16.astype(jnp.float32) / s_b + zp_b), quant_min, quant_max
    )
    ref16 = ((q_ref16 - zp_b) * s_b).astype(jnp.bfloat16)
    assert jnp.allclose(
        out_bf16.astype(jnp.float32), ref16.astype(jnp.float32), atol=1e-2
    ), "bf16 mismatch vs reference"

    print("KERNEL_OK")
</pallas_src>

<mosaic_0001>
module attributes {stable_mosaic.version = 11 : i64} {
  func.func @_fake_quant_kernel(%arg0: i32, %arg1: i32, %arg2: memref<8x256xf32, #tpu.memory_space<vmem>>, %arg3: memref<8x1xf32, #tpu.memory_space<vmem>>, %arg4: memref<8x1xf32, #tpu.memory_space<vmem>>, %arg5: memref<8x256xf32, #tpu.memory_space<vmem>>) attributes {dimension_semantics = [#tpu.dimension_semantics<parallel>, #tpu.dimension_semantics<parallel>], iteration_bounds = array<i64: 1, 1>, scalar_prefetch = 0 : i64, scratch_operands = 0 : i64, tpu.core_type = #tpu.core_type<tc>, window_params = [{transform_indices = @transform_0, window_bounds = array<i64: 8, 256>}, {transform_indices = @transform_1, window_bounds = array<i64: 8, 1>}, {transform_indices = @transform_2, window_bounds = array<i64: 8, 1>}, {transform_indices = @transform_3, window_bounds = array<i64: 8, 256>}]} {
    %c0 = arith.constant 0 : index
    %c0_0 = arith.constant 0 : index
    %0 = vector.load %arg2[%c0, %c0_0] : memref<8x256xf32, #tpu.memory_space<vmem>>, vector<8x256xf32>
    %c0_1 = arith.constant 0 : index
    %c0_2 = arith.constant 0 : index
    %1 = vector.load %arg3[%c0_1, %c0_2] : memref<8x1xf32, #tpu.memory_space<vmem>>, vector<8x1xf32>
    %c0_3 = arith.constant 0 : index
    %c0_4 = arith.constant 0 : index
    %2 = vector.load %arg4[%c0_3, %c0_4] : memref<8x1xf32, #tpu.memory_space<vmem>>, vector<8x1xf32>
    %cst = arith.constant 1.000000e+00 : f32
    %3 = vector.broadcast %cst : f32 to vector<8x1xf32>
    %4 = arith.divf %3, %1 : vector<8x1xf32>
    %5 = vector.broadcast %4 : vector<8x1xf32> to vector<8x256xf32>
    %6 = arith.mulf %0, %5 : vector<8x256xf32>
    %7 = vector.broadcast %2 : vector<8x1xf32> to vector<8x256xf32>
    %8 = arith.addf %6, %7 : vector<8x256xf32>
    %9 = math.roundeven %8 : vector<8x256xf32>
    %cst_5 = arith.constant -1.280000e+02 : f32
    %cst_6 = arith.constant 1.270000e+02 : f32
    %10 = vector.broadcast %cst_5 : f32 to vector<8x256xf32>
    %11 = arith.maximumf %10, %9 : vector<8x256xf32>
    %12 = vector.broadcast %cst_6 : f32 to vector<8x256xf32>
    %13 = arith.minimumf %12, %11 : vector<8x256xf32>
    %14 = vector.broadcast %2 : vector<8x1xf32> to vector<8x256xf32>
    %15 = arith.subf %13, %14 : vector<8x256xf32>
    %16 = vector.broadcast %1 : vector<8x1xf32> to vector<8x256xf32>
    %17 = arith.mulf %15, %16 : vector<8x256xf32>
    %c0_7 = arith.constant 0 : index
    %c0_8 = arith.constant 0 : index
    %18 = vector.load %arg5[%c0_7, %c0_8] : memref<8x256xf32, #tpu.memory_space<vmem>>, vector<8x256xf32>
    tpu.vector_store %arg5[%c0_7, %c0_8], %17 {strides = array<i32>} : memref<8x256xf32, #tpu.memory_space<vmem>>, vector<8x256xf32>,
    return
  }
  func.func @transform_0(%arg0: i32, %arg1: i32) -> (i32, i32) {
    %c0_i32 = arith.constant 0 : i32
    return %arg0, %arg1 : i32, i32
  }
  func.func @transform_1(%arg0: i32, %arg1: i32) -> (i32, i32) {
    %c0_i32 = arith.constant 0 : i32
    %c0_i32_0 = arith.constant 0 : i32
    return %arg0, %c0_i32 : i32, i32
  }
  func.func @transform_2(%arg0: i32, %arg1: i32) -> (i32, i32) {
    %c0_i32 = arith.constant 0 : i32
    %c0_i32_0 = arith.constant 0 : i32
    return %arg0, %c0_i32 : i32, i32
  }
  func.func @transform_3(%arg0: i32, %arg1: i32) -> (i32, i32) {
    %c0_i32 = arith.constant 0 : i32
    return %arg0, %arg1 : i32, i32
  }
}

</mosaic_0001>

<llo_original>
// kernel: tpu_custom_call.1
$region0: #{tpu_custom_call.1}
  #allocation0 [shape = 'u32[]', space=smem, size = 0x4, offset = 0x4, fixed_abs, tag = 'smem constant byte address 0x4 - core index']
  #allocation1 [shape = 'u32[144,128]{1,0:T(1,128)}', space=vmem, size = 0x12000, scoped, tag = 'internal scratch']
  %s0 = inlined_call_operand.vmem [shape: f32[8,256], index: 0, kind: input, shape index: {}]
  %s1 = inlined_call_operand.vmem [shape: f32[8,1], index: 1, kind: input, shape index: {}]
  %s2 = inlined_call_operand.vmem [shape: f32[8,1], index: 2, kind: input, shape index: {}]
  %s3 = inlined_call_operand.hbm [shape: f32[8,256], index: 3, kind: output, shape index: {}]
  %s4 = sld [smem:[#allocation0]]
  $region22: #{tpu_custom_call.1} parent=0
    _
  %s6 = ssub.s32 1, %s4
  %s7 = scalar_select 0, %s6, %s4
  $region1: #{tpu_custom_call.1} parent=0
    #allocation2 [shape = 'u8[8192]{0}', space=vmem, size = 0x2000, scoped, tag = 'output window, operand 0, single buffered']
    #allocation3 [shape = 's32[1]{0}', space=sflag, size = 0x4, scoped, tag = 'scoped memory for tpu_custom_call.1']
    %8 = vsyncpa [#allocation3], 0
    // Predicated region
    $region2: #{tpu_custom_call.1} parent=1 // pred_check
      _
    $region3: #{tpu_custom_call.1} parent=1 // pred_check_branch
      %10 = sbr.rel (0) target = $region5
    $region4: #{tpu_custom_call.1} parent=1 // pred_region
      _
    $region5: #{tpu_custom_call.1} parent=1 // pred_fallthru
      _
    // Predicated region
    $region6: #{tpu_custom_call.1} parent=1 // pred_check
      _
    $region7: #{tpu_custom_call.1} parent=1 // pred_check_branch
      %12 = sbr.rel (0) target = $region9
    $region8: #{tpu_custom_call.1} parent=1 // pred_region
      _
    $region9: #{tpu_custom_call.1} parent=1 // pred_fallthru
      _
    // Predicated region
    $region10: #{tpu_custom_call.1} parent=1 // pred_check
      _
    $region11: #{tpu_custom_call.1} parent=1 // pred_check_branch
      %14 = sbr.rel (0) target = $region13
    $region12: #{tpu_custom_call.1} parent=1 // pred_region
      _
    $region13: #{tpu_custom_call.1} parent=1 // pred_fallthru
      _
    %v15 = vld [vmem:[%s0] sm:$0xff]
    %v16 = vld [vmem:[%s0 + $0x8] sm:$0xff]
    %v17 = vld [vmem:[%s1] sm:$0xff]
    %v18 = vld [vmem:[%s2] sm:$0xff]
    %v19 = vrcp.pop %v17
    %v20 = vmul.f32 1.0, %v19
    %22 = vset.pattern.permute.xlu0 0
    %23 = vperm.xlu0 %22, %v20
    %v24 = vpop.permute.xlu0 %23
    %v26 = vmul.f32 %v15, %v24
    %v27 = vmul.f32 %v16, %v24
    %29 = vset.pattern.permute.xlu0 0
    %30 = vperm.xlu0 %29, %v18
    %v31 = vpop.permute.xlu0 %30
    %v33 = vadd.f32 %v26, %v31
    %v34 = vadd.f32 %v27, %v31
    %v35 = vround.ne.pseudo %v33
    %v36 = vround.ne.pseudo %v34
    %v37 = vmax.f32 %v35, -128.0
    %v38 = vmax.f32 %v36, -128.0
    %v39 = vmin.f32 %v37, 127.0
    %v40 = vmin.f32 %v38, 127.0
    %v41 = vsub.f32 %v39, %v31
    %v42 = vsub.f32 %v40, %v31
    %44 = vset.pattern.permute.xlu0 0
    %45 = vperm.xlu0 %44, %v17
    %v46 = vpop.permute.xlu0 %45
    %v48 = vmul.f32 %v41, %v46
    %v49 = vmul.f32 %v42, %v46
    %50 = vst [vmem:[#allocation2] sm:$0xff] %v48
    %51 = vst [vmem:[#allocation2 + $0x8] sm:$0xff] %v49
    // Predicated region
    $region14: #{tpu_custom_call.1} parent=1 // pred_check
      _
    $region15: #{tpu_custom_call.1} parent=1 // pred_check_branch
      %53 = sbr.rel (0) target = $region17
    $region16: #{tpu_custom_call.1} parent=1 // pred_region
      %s55 = ssub.s32 256, 256
      %56 = vsyncadd [#allocation3], %s55
      %s58 = sshll.u32 [#allocation2], 4
      %s59 = int_to_ptr.vmem [resolvable:$true] %s58
      %61 = dma.vmem_to_hbm [thread:$0]  %s59, 256, %s3, [#allocation3]
    $region17: #{tpu_custom_call.1} parent=1 // pred_fallthru
      _
    // Predicated region
    $region18: #{tpu_custom_call.1} parent=1 // pred_check
      _
    $region19: #{tpu_custom_call.1} parent=1 // pred_check_branch
      %63 = sbr.rel (0) target = $region21
    $region20: #{tpu_custom_call.1} parent=1 // pred_region
      %64 = dma.done [#allocation3], 256
    $region21: #{tpu_custom_call.1} parent=1 // pred_fallthru
      _
    %65 = vsyncpa [#allocation3], 1

</llo_original>
